<compile_context>
chip_gen: v5e
topology: v5e:2x2
jax: 0.10.0
libtpu: 0.0.40
codegen_flags: <defaults>
</compile_context>

<pallas_src>
import functools

import jax
import jax.numpy as jnp
from jax import lax
from jax.experimental import pallas as pl
from jax.experimental.pallas import tpu as pltpu


def _round_up(x, m):
    return ((x + m - 1) // m) * m


def _pick_row_tile(m_rows, target=512, align=16):
    """Largest multiple of `align` dividing m_rows that is <= target, else m_rows."""
    best = None
    d = align
    while d <= min(m_rows, target):
        if m_rows % d == 0:
            best = d
        d += align
    return best if best is not None else m_rows


def _pick_t_chunk(seq_len, cap=32):
    """Prefer a chunk that divides T exactly (no tail mask); else pad + mask."""
    best = 1
    for d in range(1, min(seq_len, cap) + 1):
        if seq_len % d == 0:
            best = d
    if best >= 4 or best == seq_len:
        return best
    return min(cap, 8)


def _vmem_limit(*block_bytes):
    """2x (double buffering) + headroom, clamped to a range safe on v5e/v6e/v7x."""
    total = sum(int(b) for b in block_bytes)
    return int(min(max(2 * total + (8 << 20), 32 << 20), 96 << 20))


def _sigmoid_tanh(x):
    # Exact identity: sigmoid(x) = 0.5 * (tanh(0.5 x) + 1); one EUP op per gate.
    return 0.5 * (jnp.tanh(0.5 * x) + 1.0)


# -----------------------------------------------------------------------------
# Kernel 1: hoisted input projection  gates_x = X_flat @ W_ih^T + b
# bf16 x bf16 -> f32 accumulate, bf16 output. Tiled over rows AND the 4*Hp axis.
# -----------------------------------------------------------------------------
def _proj_kernel(x_ref, w_ref, b_ref, o_ref):
    acc = jnp.dot(x_ref[...], w_ref[...], preferred_element_type=jnp.float32)
    o_ref[...] = (acc + b_ref[...]).astype(o_ref.dtype)


def input_projection(x_flat, w_t, bias, row_tile, n_tile):
    """x_flat: (M, D) bf16, w_t: (D, G) bf16, bias: (1, G) f32 -> (M, G) bf16."""
    M, D = x_flat.shape
    G = w_t.shape[-1]
    vmem = _vmem_limit(row_tile * D * 2,      # x tile (bf16)
                       D * n_tile * 2,        # weight tile (bf16)
                       n_tile * 4,            # bias tile (f32)
                       row_tile * n_tile * 2  # output tile (bf16)
                       )
    return pl.pallas_call(
        _proj_kernel,
        out_shape=jax.ShapeDtypeStruct((M, G), jnp.bfloat16),
        grid=(M // row_tile, G // n_tile),
        in_specs=[
            pl.BlockSpec((row_tile, D), lambda m, n: (m, 0)),
            pl.BlockSpec((D, n_tile), lambda m, n: (0, n)),
            pl.BlockSpec((1, n_tile), lambda m, n: (0, n)),
        ],
        out_specs=pl.BlockSpec((row_tile, n_tile), lambda m, n: (m, n)),
        compiler_params=pltpu.CompilerParams(
            dimension_semantics=("parallel", "parallel"),
            vmem_limit_bytes=vmem),
    )(x_flat, w_t, bias)


# -----------------------------------------------------------------------------
# Kernel 2: recurrent part. Grid iterates over chunks of t_chunk timesteps;
# inside each chunk a (partially) unrolled fori_loop runs the serial recurrence
# keeping h/c (f32) in registers. Only the bf16 (B_pad, Hp) @ (Hp, 4*Hp) dot
# (f32 accumulate) remains here.
# -----------------------------------------------------------------------------
def _lstm_recurrent_kernel(gx_ref, whh_ref, h0_ref, c0_ref,
                           hall_ref, cn_ref, h_sc, c_sc,
                           *, hidden_pad, t_chunk, seq_len, seq_len_pad, unroll):
    tc = pl.program_id(0)

    @pl.when(tc == 0)
    def _():
        h_sc[...] = h0_ref[...]
        c_sc[...] = c0_ref[...]

    w_hh = whh_ref[...]                       # resident (Hp, 4*Hp) bf16
    Hp = hidden_pad
    mask_tail = (seq_len_pad != seq_len)      # static python bool

    def step(i, carry):
        h, c = carry                          # f32 carries
        gates = gx_ref[i] + jnp.dot(h.astype(jnp.bfloat16), w_hh,
                                    preferred_element_type=jnp.float32)
        # Gate blocks are lane-aligned (each gate owns its own Hp block).
        i_g = _sigmoid_tanh(gates[:, 0 * Hp:1 * Hp])
        f_g = _sigmoid_tanh(gates[:, 1 * Hp:2 * Hp])
        g_g = jnp.tanh(gates[:, 2 * Hp:3 * Hp])
        o_g = _sigmoid_tanh(gates[:, 3 * Hp:4 * Hp])
        c_new = f_g * c + i_g * g_g
        h_new = o_g * jnp.tanh(c_new)
        # Padded tail timesteps (only present when mask_tail) write bounded
        # garbage into h_all; they are never read for outputs and never
        # advance the masked carry.
        hall_ref[i] = h_new.astype(hall_ref.dtype)
        if mask_tail:
            valid = (tc * t_chunk + i) < seq_len
            h_new = jnp.where(valid, h_new, h)
            c_new = jnp.where(valid, c_new, c)
        return h_new, c_new

    h_fin, c_fin = lax.fori_loop(0, t_chunk, step,
                                 (h_sc[...], c_sc[...]), unroll=unroll)
    h_sc[...] = h_fin
    c_sc[...] = c_fin

    @pl.when(tc == pl.num_programs(0) - 1)
    def _():
        cn_ref[...] = c_fin


def lstm_layer(gates_x, w_hh_t, h0, c0, *, seq_len, t_chunk):
    """gates_x: (T_pad, B_pad, 4*Hp) bf16 (precomputed X@W_ih^T + b)
       w_hh_t:  (Hp, 4*Hp) bf16
       h0, c0:  (B_pad, Hp) f32
       returns  h_all (T_pad, B_pad, Hp) bf16, cn (B_pad, Hp) f32."""
    T_pad, B_pad, G = gates_x.shape
    Hp = w_hh_t.shape[0]

    # Limit unroll for large H: each live step holds a (B_pad, 4*Hp) f32 `gates`
    # (4*Hp/128 vregs); full unroll at Hp >= 512 would spill the 64-vreg file.
    unroll = t_chunk if Hp <= 256 else (4 if Hp <= 512 else 2)

    kernel = functools.partial(_lstm_recurrent_kernel,
                               hidden_pad=Hp, t_chunk=t_chunk,
                               seq_len=seq_len, seq_len_pad=T_pad,
                               unroll=unroll)

    vmem = _vmem_limit(t_chunk * B_pad * G * 2,   # gates_x chunk (bf16)
                       Hp * G * 2,                # resident W_hh (bf16)
                       2 * B_pad * Hp * 4,        # h0 + c0 (f32)
                       t_chunk * B_pad * Hp * 2,  # h_all chunk (bf16)
                       B_pad * Hp * 4,            # cn (f32)
                       2 * B_pad * Hp * 4)        # h/c scratch (f32)

    out_shapes = (
        jax.ShapeDtypeStruct((T_pad, B_pad, Hp), jnp.bfloat16),  # h_all
        jax.ShapeDtypeStruct((B_pad, Hp), jnp.float32),          # cn
    )

    h_all, cn = pl.pallas_call(
        kernel,
        out_shape=out_shapes,
        grid=(T_pad // t_chunk,),
        in_specs=[
            pl.BlockSpec((t_chunk, B_pad, G), lambda t: (t, 0, 0)),  # gates_x chunk
            pl.BlockSpec((Hp, G), lambda t: (0, 0)),                 # W_hh^T (resident)
            pl.BlockSpec((B_pad, Hp), lambda t: (0, 0)),             # h0
            pl.BlockSpec((B_pad, Hp), lambda t: (0, 0)),             # c0
        ],
        out_specs=(
            pl.BlockSpec((t_chunk, B_pad, Hp), lambda t: (t, 0, 0)),
            pl.BlockSpec((B_pad, Hp), lambda t: (0, 0)),
        ),
        scratch_shapes=[
            pltpu.VMEM((B_pad, Hp), jnp.float32),  # h carry
            pltpu.VMEM((B_pad, Hp), jnp.float32),  # c carry
        ],
        compiler_params=pltpu.CompilerParams(
            dimension_semantics=("arbitrary",),
            vmem_limit_bytes=vmem),
    )(gates_x, w_hh_t, h0, c0)
    return h_all, cn


# -----------------------------------------------------------------------------
# Kernel 3: final Linear on the last timestep (padded lane-dense shapes).
# -----------------------------------------------------------------------------
def _linear_kernel(x_ref, w_ref, b_ref, o_ref):
    o_ref[...] = (jnp.dot(x_ref[...], w_ref[...],
                          preferred_element_type=jnp.float32)
                  + b_ref[...]).astype(o_ref.dtype)


def linear(x_pad, w_t_pad, b_pad):
    """x_pad: (B_pad, Hp) bf16, w_t_pad: (Hp, O_pad) bf16, b_pad: (1, O_pad) f32."""
    B_pad = x_pad.shape[0]
    O_pad = w_t_pad.shape[-1]
    return pl.pallas_call(
        _linear_kernel,
        out_shape=jax.ShapeDtypeStruct((B_pad, O_pad), jnp.float32),
    )(x_pad, w_t_pad, b_pad)


# -----------------------------------------------------------------------------
# Parameters (synthetic, deterministic, matching nn.LSTM + nn.Linear shapes).
# Kernel weights are pre-transposed, zero-padded, gate-lane-aligned and bf16.
# -----------------------------------------------------------------------------
def _pad_gate_cols(w, rows_pad, h, h_pad):
    """w: (rows, 4*h) with gate blocks of width h -> (rows_pad, 4*h_pad),
    each gate block placed at a lane-aligned offset g*h_pad."""
    rows = w.shape[0]
    out = jnp.zeros((rows_pad, 4 * h_pad), jnp.float32)
    for g in range(4):
        out = out.at[:rows, g * h_pad:g * h_pad + h].set(w[:, g * h:(g + 1) * h])
    return out


class LSTMParams:
    def __init__(self, key, input_dim, hidden_dim, layer_dim, output_dim):
        self.input_dim = input_dim
        self.hidden_dim = hidden_dim
        self.layer_dim = layer_dim
        self.output_dim = output_dim
        self.hidden_pad = _round_up(hidden_dim, 128)
        self.output_pad = _round_up(output_dim, 128)

        H, Hp = hidden_dim, self.hidden_pad
        k = 1.0 / jnp.sqrt(hidden_dim)
        keys = jax.random.split(key, 4 * layer_dim + 2)
        self.layers = []
        for l in range(layer_dim):
            in_d = input_dim if l == 0 else hidden_dim
            in_d_pad = input_dim if l == 0 else Hp
            k0, k1, k2, k3 = keys[4 * l: 4 * l + 4]
            w_ih = jax.random.uniform(k0, (4 * H, in_d), jnp.float32, -k, k)
            w_hh = jax.random.uniform(k1, (4 * H, H), jnp.float32, -k, k)
            b_ih = jax.random.uniform(k2, (4 * H,), jnp.float32, -k, k)
            b_hh = jax.random.uniform(k3, (4 * H,), jnp.float32, -k, k)

            w_ih_t = w_ih.T                     # (in_d, 4H)
            w_hh_t = w_hh.T                     # (H, 4H)
            bias = (b_ih + b_hh)[None, :]       # (1, 4H)

            self.layers.append(dict(
                # padded, gate-aligned, bf16 versions for the kernels
                w_ih_t=_pad_gate_cols(w_ih_t, in_d_pad, H, Hp).astype(jnp.bfloat16),
                w_hh_t=_pad_gate_cols(w_hh_t, Hp, H, Hp).astype(jnp.bfloat16),
                bias=_pad_gate_cols(bias, 1, H, Hp),              # f32 (1, 4*Hp)
                # raw (unpadded, f32) copies for the pure-JAX reference
                w_ih_t_raw=w_ih_t, w_hh_t_raw=w_hh_t, bias_raw=bias,
            ))

        kf = 1.0 / jnp.sqrt(hidden_dim)
        w_fc = jax.random.uniform(keys[-2], (output_dim, hidden_dim),
                                  jnp.float32, -kf, kf)
        b_fc = jax.random.uniform(keys[-1], (output_dim,), jnp.float32, -kf, kf)
        self.w_fc_t = (jnp.zeros((Hp, self.output_pad), jnp.float32)
                       .at[:H, :output_dim].set(w_fc.T)).astype(jnp.bfloat16)
        self.b_fc = (jnp.zeros((1, self.output_pad), jnp.float32)
                     .at[0, :output_dim].set(b_fc))
        self.w_fc_t_raw = w_fc.T
        self.b_fc_raw = b_fc[None, :]


# -----------------------------------------------------------------------------
# Full forward, matching LSTM.forward: x (B, T, D) -> (out, hn, cn).
# -----------------------------------------------------------------------------
def lstm_forward(params: LSTMParams, x_btd, h0=None, c0=None):
    B, T, D = x_btd.shape
    L, H = params.layer_dim, params.hidden_dim
    Hp = params.hidden_pad
    B_pad = _round_up(B, 8)
    t_chunk = _pick_t_chunk(T)
    T_pad = _round_up(T, t_chunk)

    if h0 is None or c0 is None:
        h0 = jnp.zeros((L, B, H), jnp.float32)
        c0 = jnp.zeros((L, B, H), jnp.float32)

    # time-major + pad batch/seq; padded lanes/sublanes stay exactly zero.
    x_tbd = jnp.transpose(x_btd, (1, 0, 2)).astype(jnp.bfloat16)
    x_pad = jnp.zeros((T_pad, B_pad, D), jnp.bfloat16).at[:T, :B, :].set(x_tbd)
    h0_pad = jnp.zeros((L, B_pad, Hp), jnp.float32).at[:, :B, :H].set(h0)
    c0_pad = jnp.zeros((L, B_pad, Hp), jnp.float32).at[:, :B, :H].set(c0)

    M = T_pad * B_pad
    row_tile = _pick_row_tile(M, target=512)       # byte-budget row tile
    n_tile = min(4 * Hp, 512)                      # divides 4*Hp (Hp % 128 == 0)

    hn_list, cn_list = [], []
    layer_in = x_pad                               # (T_pad, B_pad, d_eff) bf16
    for l in range(L):
        p = params.layers[l]
        d_eff = layer_in.shape[-1]
        # (1) hoisted input projection: one big bf16 matmul over all timesteps.
        x_flat = layer_in.reshape(M, d_eff)
        gates_x = input_projection(x_flat, p["w_ih_t"], p["bias"],
                                   row_tile, n_tile)
        gates_x = gates_x.reshape(T_pad, B_pad, 4 * Hp)
        # (2) chunked serial recurrence.
        h_all, cn_l = lstm_layer(gates_x, p["w_hh_t"], h0_pad[l], c0_pad[l],
                                 seq_len=T, t_chunk=t_chunk)
        hn_list.append(h_all[T - 1, :B, :H].astype(jnp.float32))
        cn_list.append(cn_l[:B, :H])
        layer_in = h_all

    # Final Linear on the last real timestep of the top layer.
    out_pad = linear(layer_in[T - 1], params.w_fc_t, params.b_fc)
    out = out_pad[:B, :params.output_dim]
    hn = jnp.stack(hn_list, axis=0)
    cn = jnp.stack(cn_list, axis=0)
    return out, hn, cn


# -----------------------------------------------------------------------------
# Pure-JAX f32 reference (lax.scan) for sanity checking.
# -----------------------------------------------------------------------------
def _reference_forward(params: LSTMParams, x_btd):
    B, T, D = x_btd.shape
    L, H = params.layer_dim, params.hidden_dim
    layer_in = jnp.transpose(x_btd, (1, 0, 2))
    hn_list, cn_list = [], []
    for l in range(L):
        p = params.layers[l]

        def step(carry, x_t, p=p):
            h, c = carry
            gates = x_t @ p["w_ih_t_raw"] + h @ p["w_hh_t_raw"] + p["bias_raw"]
            i, f, g, o = jnp.split(gates, 4, axis=-1)
            i, f, o = jax.nn.sigmoid(i), jax.nn.sigmoid(f), jax.nn.sigmoid(o)
            g = jnp.tanh(g)
            c = f * c + i * g
            h = o * jnp.tanh(c)
            return (h, c), h

        (hn_l, cn_l), h_all = jax.lax.scan(
            step, (jnp.zeros((B, H)), jnp.zeros((B, H))), layer_in)
        hn_list.append(hn_l)
        cn_list.append(cn_l)
        layer_in = h_all
    out = layer_in[-1] @ params.w_fc_t_raw + params.b_fc_raw
    return out, jnp.stack(hn_list), jnp.stack(cn_list)


if __name__ == "__main__":
    # Small shapes consistent with the module's forward (batch_first input).
    batch, seq, input_dim, hidden_dim, layer_dim, output_dim = 2, 8, 16, 32, 2, 8

    key = jax.random.PRNGKey(0)
    pkey, xkey = jax.random.split(key)
    params = LSTMParams(pkey, input_dim, hidden_dim, layer_dim, output_dim)
    x = jax.random.normal(xkey, (batch, seq, input_dim), jnp.float32)

    out, hn, cn = lstm_forward(params, x)
    jax.block_until_ready((out, hn, cn))

    # Sanity check against the pure-JAX f32 reference (bf16 operands -> looser tol).
    out_r, hn_r, cn_r = _reference_forward(params, x)
    assert out.shape == (batch, output_dim)
    assert hn.shape == (layer_dim, batch, hidden_dim)
    assert cn.shape == (layer_dim, batch, hidden_dim)
    assert jnp.allclose(out, out_r, rtol=3e-2, atol=3e-2)
    assert jnp.allclose(hn, hn_r, rtol=3e-2, atol=3e-2)
    assert jnp.allclose(cn, cn_r, rtol=3e-2, atol=3e-2)

    print("KERNEL_OK")
</pallas_src>

<mosaic_0001>
module attributes {stable_mosaic.version = 11 : i64} {
  func.func @_proj_kernel(%arg0: i32, %arg1: i32, %arg2: memref<64x16xbf16, #tpu.memory_space<vmem>>, %arg3: memref<16x512xbf16, #tpu.memory_space<vmem>>, %arg4: memref<1x512xf32, #tpu.memory_space<vmem>>, %arg5: memref<64x512xbf16, #tpu.memory_space<vmem>>) attributes {dimension_semantics = [#tpu.dimension_semantics<parallel>, #tpu.dimension_semantics<parallel>], iteration_bounds = array<i64: 1, 1>, scalar_prefetch = 0 : i64, scratch_operands = 0 : i64, tpu.core_type = #tpu.core_type<tc>, window_params = [{transform_indices = @transform_0, window_bounds = array<i64: 64, 16>}, {transform_indices = @transform_1, window_bounds = array<i64: 16, 512>}, {transform_indices = @transform_2, window_bounds = array<i64: 1, 512>}, {transform_indices = @transform_3, window_bounds = array<i64: 64, 512>}]} {
    %c0 = arith.constant 0 : index
    %c0_0 = arith.constant 0 : index
    %0 = vector.load %arg2[%c0, %c0_0] : memref<64x16xbf16, #tpu.memory_space<vmem>>, vector<64x16xbf16>
    %c0_1 = arith.constant 0 : index
    %c0_2 = arith.constant 0 : index
    %1 = vector.load %arg3[%c0_1, %c0_2] : memref<16x512xbf16, #tpu.memory_space<vmem>>, vector<16x512xbf16>
    %cst = arith.constant dense<0.000000e+00> : vector<64x512xf32>
    %2 = tpu.matmul %0, %1, %cst {dimension_numbers = #tpu.dot_dimension_numbers<[1], [0], [0], [1], [0, 0, 1, 1], [], []>} : vector<64x16xbf16>, vector<16x512xbf16>, vector<64x512xf32> -> vector<64x512xf32>
    %c0_3 = arith.constant 0 : index
    %c0_4 = arith.constant 0 : index
    %3 = vector.load %arg4[%c0_3, %c0_4] : memref<1x512xf32, #tpu.memory_space<vmem>>, vector<1x512xf32>
    %4 = vector.broadcast %3 : vector<1x512xf32> to vector<64x512xf32>
    %5 = arith.addf %2, %4 : vector<64x512xf32>
    %6 = arith.truncf %5 : vector<64x512xf32> to vector<64x512xbf16>
    %c0_5 = arith.constant 0 : index
    %c0_6 = arith.constant 0 : index
    %7 = vector.load %arg5[%c0_5, %c0_6] : memref<64x512xbf16, #tpu.memory_space<vmem>>, vector<64x512xbf16>
    tpu.vector_store %arg5[%c0_5, %c0_6], %6 {strides = array<i32>} : memref<64x512xbf16, #tpu.memory_space<vmem>>, vector<64x512xbf16>,
    return
  }
  func.func @transform_0(%arg0: i32, %arg1: i32) -> (i32, i32) {
    %c0_i32 = arith.constant 0 : i32
    %c0_i32_0 = arith.constant 0 : i32
    return %arg0, %c0_i32 : i32, i32
  }
  func.func @transform_1(%arg0: i32, %arg1: i32) -> (i32, i32) {
    %c0_i32 = arith.constant 0 : i32
    %c0_i32_0 = arith.constant 0 : i32
    return %c0_i32, %arg1 : i32, i32
  }
  func.func @transform_2(%arg0: i32, %arg1: i32) -> (i32, i32) {
    %c0_i32 = arith.constant 0 : i32
    %c0_i32_0 = arith.constant 0 : i32
    return %c0_i32, %arg1 : i32, i32
  }
  func.func @transform_3(%arg0: i32, %arg1: i32) -> (i32, i32) {
    %c0_i32 = arith.constant 0 : i32
    return %arg0, %arg1 : i32, i32
  }
}

</mosaic_0001>

<llo_original>
// kernel: tpu_custom_call.1
$region0: #{tpu_custom_call.1}
  #allocation0 [shape = 'u32[]', space=smem, size = 0x4, offset = 0x4, fixed_abs, tag = 'smem constant byte address 0x4 - core index']
  #allocation1 [shape = 'u32[72,128]{1,0:T(1,128)}', space=vmem, size = 0x9000, scoped, tag = 'internal scratch']
  %s0 = inlined_call_operand.vmem [shape: bf16[64,16], index: 0, kind: input, shape index: {}]
  %s1 = inlined_call_operand.vmem [shape: bf16[16,512], index: 1, kind: input, shape index: {}]
  %s2 = inlined_call_operand.vmem [shape: f32[1,512], index: 2, kind: input, shape index: {}]
  %s3 = inlined_call_operand.hbm [shape: bf16[64,512], index: 3, kind: output, shape index: {}]
  %s4 = sld [smem:[#allocation0]]
  $region22: #{tpu_custom_call.1} parent=0
    _
  %s6 = ssub.s32 1, %s4
  %s7 = scalar_select 0, %s6, %s4
  $region1: #{tpu_custom_call.1} parent=0
    #allocation2 [shape = 'u8[65536]{0}', space=vmem, size = 0x10000, scoped, tag = 'output window, operand 0, single buffered']
    #allocation3 [shape = 's32[1]{0}', space=sflag, size = 0x4, scoped, tag = 'scoped memory for tpu_custom_call.1']
    %8 = vsyncpa [#allocation3], 0
    // Predicated region
    $region2: #{tpu_custom_call.1} parent=1 // pred_check
      _
    $region3: #{tpu_custom_call.1} parent=1 // pred_check_branch
      %10 = sbr.rel (0) target = $region5
    $region4: #{tpu_custom_call.1} parent=1 // pred_region
      _
    $region5: #{tpu_custom_call.1} parent=1 // pred_fallthru
      _
    // Predicated region
    $region6: #{tpu_custom_call.1} parent=1 // pred_check
      _
    $region7: #{tpu_custom_call.1} parent=1 // pred_check_branch
      %12 = sbr.rel (0) target = $region9
    $region8: #{tpu_custom_call.1} parent=1 // pred_region
      _
    $region9: #{tpu_custom_call.1} parent=1 // pred_fallthru
      _
    // Predicated region
    $region10: #{tpu_custom_call.1} parent=1 // pred_check
      _
    $region11: #{tpu_custom_call.1} parent=1 // pred_check_branch
      %14 = sbr.rel (0) target = $region13
    $region12: #{tpu_custom_call.1} parent=1 // pred_region
      _
    $region13: #{tpu_custom_call.1} parent=1 // pred_fallthru
      _
    %v16 = vld [vmem:[%s0] sm:$0xf]
    %v17 = vld [vmem:[%s0 + $0x4] sm:$0xf]
    %v18 = vld [vmem:[%s0 + $0x8] sm:$0xf]
    %v19 = vld [vmem:[%s0 + $0xc] sm:$0xf]
    %v20 = vld [vmem:[%s0 + $0x10] sm:$0xf]
    %v21 = vld [vmem:[%s0 + $0x14] sm:$0xf]
    %v22 = vld [vmem:[%s0 + $0x18] sm:$0xf]
    %v23 = vld [vmem:[%s0 + $0x1c] sm:$0xf]
    %v24 = vld [vmem:[%s1] sm:$0xff]
    %v25 = vld [vmem:[%s1 + $0x8] sm:$0xff]
    %v26 = vld [vmem:[%s1 + $0x10] sm:$0xff]
    %v27 = vld [vmem:[%s1 + $0x18] sm:$0xff]
    %v28 = vld [vmem:[%s2] sm:$0xf]
    %v30 = vperm.slane %v28, 0
    %v31 = vperm.slane %v28, 1
    %v32 = vperm.slane %v28, 2
    %v33 = vperm.slane %v28, 3
    %v46 = vunpack.c.l.b16 %v16
    %v47 = vunpack.c.l.b16 %v17
    %v48 = vunpack.c.l.b16 %v18
    %v49 = vunpack.c.l.b16 %v19
    %v50 = vunpack.c.l.b16 %v20
    %v51 = vunpack.c.l.b16 %v21
    %v52 = vunpack.c.l.b16 %v22
    %v53 = vunpack.c.l.b16 %v23
    %v54 = vpack.c.b16 %v47, %v46
    %v55 = vpack.c.b16 %v49, %v48
    %v56 = vpack.c.b16 %v51, %v50
    %v57 = vpack.c.b16 %v53, %v52
    %v62 = vunpack.c.l.b16 %v24
    %v63 = vunpack.c.h.b16 %v24
    %v64 = vunpack.c.l.b16 %v25
    %v65 = vunpack.c.h.b16 %v25
    %v66 = vunpack.c.l.b16 %v26
    %v67 = vunpack.c.h.b16 %v26
    %v68 = vunpack.c.l.b16 %v27
    %v69 = vunpack.c.h.b16 %v27
    %v70 = vpack.c.b16 %v66, %v62
    %v71 = vpack.c.b16 %v67, %v63
    %v72 = vpack.c.b16 %v68, %v64
    %v73 = vpack.c.b16 %v69, %v65
    %vm78 = vcmask 130048
    %v80 = vsel %vm78, %v54, 0
    %v83 = vsel %vm78, %v55, 0
    %v86 = vsel %vm78, %v56, 0
    %v89 = vsel %vm78, %v57, 0
    %91 = vmatpush.bf16.msra.mxu0 0
    %92 = vmatpush.bf16.msra.mxu0 0
    %93 = vmatpush.bf16.msra.mxu0 0
    %94 = vmatpush.bf16.msra.mxu0 0
    %95 = vmatpush.bf16.msra.mxu0 0
    %96 = vmatpush.bf16.msra.mxu0 0
    %97 = vmatpush.bf16.msra.mxu0 0
    %98 = vmatpush.bf16.msra.mxu0 %v70
    %99 = vmatmul.bf16.gmra.mxu0 %v80
    %v100 = vpop.f32.mrf.mxu0
    %v101 = vadd.f32 %v30, %v100
    %v102 = vpop.f32.mrf.mxu0
    %v103 = vadd.f32 %v30, %v102
    %104 = vmatmul.bf16.gmra.mxu0 %v83
    %v105 = vpop.f32.mrf.mxu0
    %v106 = vadd.f32 %v30, %v105
    %v107 = vpop.f32.mrf.mxu0
    %v108 = vadd.f32 %v30, %v107
    %109 = vmatmul.bf16.gmra.mxu0 %v86
    %v110 = vpop.f32.mrf.mxu0
    %v111 = vadd.f32 %v30, %v110
    %v112 = vpop.f32.mrf.mxu0
    %v113 = vadd.f32 %v30, %v112
    %114 = vmatmul.bf16.gmra.mxu0 %v89
    %v115 = vpop.f32.mrf.mxu0
    %v116 = vadd.f32 %v30, %v115
    %v117 = vpop.f32.mrf.mxu0
    %v118 = vadd.f32 %v30, %v117
    %119 = vdwg.mxu0
    %120 = vmatpush.bf16.msra.mxu0 0
    %121 = vmatpush.bf16.msra.mxu0 0
    %122 = vmatpush.bf16.msra.mxu0 0
    %123 = vmatpush.bf16.msra.mxu0 0
    %124 = vmatpush.bf16.msra.mxu0 0
    %125 = vmatpush.bf16.msra.mxu0 0
    %126 = vmatpush.bf16.msra.mxu0 0
    %127 = vmatpush.bf16.msra.mxu0 %v71
    %128 = vmatmul.bf16.gmra.mxu0 %v80
    %v129 = vpop.f32.mrf.mxu0
    %v130 = vadd.f32 %v31, %v129
    %v131 = vpop.f32.mrf.mxu0
    %v132 = vadd.f32 %v31, %v131
    %133 = vmatmul.bf16.gmra.mxu0 %v83
    %v134 = vpop.f32.mrf.mxu0
    %v135 = vadd.f32 %v31, %v134
    %v136 = vpop.f32.mrf.mxu0
    %v137 = vadd.f32 %v31, %v136
    %138 = vmatmul.bf16.gmra.mxu0 %v86
    %v139 = vpop.f32.mrf.mxu0
    %v140 = vadd.f32 %v31, %v139
    %v141 = vpop.f32.mrf.mxu0
    %v142 = vadd.f32 %v31, %v141
    %143 = vmatmul.bf16.gmra.mxu0 %v89
    %v144 = vpop.f32.mrf.mxu0
    %v145 = vadd.f32 %v31, %v144
    %v146 = vpop.f32.mrf.mxu0
    %v147 = vadd.f32 %v31, %v146
    %148 = vdwg.mxu0
    %149 = vmatpush.bf16.msra.mxu0 0
    %150 = vmatpush.bf16.msra.mxu0 0
    %151 = vmatpush.bf16.msra.mxu0 0
    %152 = vmatpush.bf16.msra.mxu0 0
    %153 = vmatpush.bf16.msra.mxu0 0
    %154 = vmatpush.bf16.msra.mxu0 0
    %155 = vmatpush.bf16.msra.mxu0 0
    %156 = vmatpush.bf16.msra.mxu0 %v72
    %157 = vmatmul.bf16.gmra.mxu0 %v80
    %v158 = vpop.f32.mrf.mxu0
    %v159 = vadd.f32 %v32, %v158
    %v160 = vpop.f32.mrf.mxu0
    %v161 = vadd.f32 %v32, %v160
    %162 = vmatmul.bf16.gmra.mxu0 %v83
    %v163 = vpop.f32.mrf.mxu0
    %v164 = vadd.f32 %v32, %v163
    %v165 = vpop.f32.mrf.mxu0
    %v166 = vadd.f32 %v32, %v165
    %167 = vmatmul.bf16.gmra.mxu0 %v86
    %v168 = vpop.f32.mrf.mxu0
    %v169 = vadd.f32 %v32, %v168
    %v170 = vpop.f32.mrf.mxu0
    %v171 = vadd.f32 %v32, %v170
    %172 = vmatmul.bf16.gmra.mxu0 %v89
    %v173 = vpop.f32.mrf.mxu0
    %v174 = vadd.f32 %v32, %v173
    %v175 = vpop.f32.mrf.mxu0
    %v176 = vadd.f32 %v32, %v175
    %177 = vdwg.mxu0
    %178 = vmatpush.bf16.msra.mxu0 0
    %179 = vmatpush.bf16.msra.mxu0 0
    %180 = vmatpush.bf16.msra.mxu0 0
    %181 = vmatpush.bf16.msra.mxu0 0
    %182 = vmatpush.bf16.msra.mxu0 0
    %183 = vmatpush.bf16.msra.mxu0 0
    %184 = vmatpush.bf16.msra.mxu0 0
    %185 = vmatpush.bf16.msra.mxu0 %v73
    %186 = vmatmul.bf16.gmra.mxu0 %v80
    %v187 = vpop.f32.mrf.mxu0
    %v188 = vadd.f32 %v33, %v187
    %v189 = vpop.f32.mrf.mxu0
    %v190 = vadd.f32 %v33, %v189
    %191 = vmatmul.bf16.gmra.mxu0 %v83
    %v192 = vpop.f32.mrf.mxu0
    %v193 = vadd.f32 %v33, %v192
    %v194 = vpop.f32.mrf.mxu0
    %v195 = vadd.f32 %v33, %v194
    %196 = vmatmul.bf16.gmra.mxu0 %v86
    %v197 = vpop.f32.mrf.mxu0
    %v198 = vadd.f32 %v33, %v197
    %v199 = vpop.f32.mrf.mxu0
    %v200 = vadd.f32 %v33, %v199
    %201 = vmatmul.bf16.gmra.mxu0 %v89
    %v202 = vpop.f32.mrf.mxu0
    %v203 = vadd.f32 %v33, %v202
    %v204 = vpop.f32.mrf.mxu0
    %v205 = vadd.f32 %v33, %v204
    %206 = vdwg.mxu0
    %v207 = vpack.c.bf16 %v130, %v101
    %v208 = vpack.c.bf16 %v188, %v159
    %v209 = vpack.c.bf16 %v132, %v103
    %v210 = vpack.c.bf16 %v190, %v161
    %v211 = vpack.c.bf16 %v135, %v106
    %v212 = vpack.c.bf16 %v193, %v164
    %v213 = vpack.c.bf16 %v137, %v108
    %v214 = vpack.c.bf16 %v195, %v166
    %v215 = vpack.c.bf16 %v140, %v111
    %v216 = vpack.c.bf16 %v198, %v169
    %v217 = vpack.c.bf16 %v142, %v113
    %v218 = vpack.c.bf16 %v200, %v171
    %v219 = vpack.c.bf16 %v145, %v116
    %v220 = vpack.c.bf16 %v203, %v174
    %v221 = vpack.c.bf16 %v147, %v118
    %v222 = vpack.c.bf16 %v205, %v176
    %223 = vst [vmem:[#allocation2] sm:$0xff] %v207
    %224 = vst [vmem:[#allocation2 + $0x8] sm:$0xff] %v208
    %225 = vst [vmem:[#allocation2 + $0x10] sm:$0xff] %v209
    %226 = vst [vmem:[#allocation2 + $0x18] sm:$0xff] %v210
    %227 = vst [vmem:[#allocation2 + $0x20] sm:$0xff] %v211
    %228 = vst [vmem:[#allocation2 + $0x28] sm:$0xff] %v212
    %229 = vst [vmem:[#allocation2 + $0x30] sm:$0xff] %v213
    %230 = vst [vmem:[#allocation2 + $0x38] sm:$0xff] %v214
    %231 = vst [vmem:[#allocation2 + $0x40] sm:$0xff] %v215
    %232 = vst [vmem:[#allocation2 + $0x48] sm:$0xff] %v216
    %233 = vst [vmem:[#allocation2 + $0x50] sm:$0xff] %v217
    %234 = vst [vmem:[#allocation2 + $0x58] sm:$0xff] %v218
    %235 = vst [vmem:[#allocation2 + $0x60] sm:$0xff] %v219
    %236 = vst [vmem:[#allocation2 + $0x68] sm:$0xff] %v220
    %237 = vst [vmem:[#allocation2 + $0x70] sm:$0xff] %v221
    %238 = vst [vmem:[#allocation2 + $0x78] sm:$0xff] %v222
    // Predicated region
    $region14: #{tpu_custom_call.1} parent=1 // pred_check
      _
    $region15: #{tpu_custom_call.1} parent=1 // pred_check_branch
      %240 = sbr.rel (0) target = $region17
    $region16: #{tpu_custom_call.1} parent=1 // pred_region
      %242 = vsyncadd [#allocation3], 0
      %s243 = sshll.u32 [#allocation2], 4
      %s244 = int_to_ptr.vmem [resolvable:$true] %s243
      %s245 = sshll.u32 %s3, 4
      %s246 = int_to_ptr.hbm [resolvable:$true] %s245
      %251 = dma.vmem_to_hbm [thread:$0]  %s244, 2048, %s246, [#allocation3], 256, 256, 16
    $region17: #{tpu_custom_call.1} parent=1 // pred_fallthru
      _
    // Predicated region
    $region18: #{tpu_custom_call.1} parent=1 // pred_check
      _
    $region19: #{tpu_custom_call.1} parent=1 // pred_check_branch
      %253 = sbr.rel (0) target = $region21
    $region20: #{tpu_custom_call.1} parent=1 // pred_region
      %255 = dma.done [#allocation3], 2048
    $region21: #{tpu_custom_call.1} parent=1 // pred_fallthru
      _
    %256 = vsyncpa [#allocation3], 1

</llo_original>
